<compile_context>
chip_gen: v7x
topology: tpu7x:2x2x1
jax: 0.10.0
libtpu: 0.0.40
codegen_flags: <defaults>
</compile_context>

<pallas_src>
import functools

import jax
import jax.numpy as jnp
from jax.experimental import pallas as pl
from jax.experimental.pallas import tpu as pltpu

LANE = 128        # TPU lane width; also the hidden size of the MLP
HIDDEN = 128
MAX_TILE_B = 512  # batch tile (sweet spot for HBM-roofline pipelining)


def _round_up(x, m):
    return (x + m - 1) // m * m


def actor_kernel(x_ref, w1_ref, b1_ref, w2_ref, b2_ref, w3_ref, b3_ref, o_ref):
    x = x_ref[...]                                              # (TILE_B, 128) f32
    # fc1 + ReLU  (bf16 MXU inputs, f32 accumulation & elementwise)
    h1 = jnp.dot(x.astype(jnp.bfloat16), w1_ref[...],
                 preferred_element_type=jnp.float32) + b1_ref[...]
    h1 = jnp.maximum(h1, 0.0)
    # fc2 + ReLU
    h2 = jnp.dot(h1.astype(jnp.bfloat16), w2_ref[...],
                 preferred_element_type=jnp.float32) + b2_ref[...]
    h2 = jnp.maximum(h2, 0.0)
    # fc3 + tanh (kept f32: tiny-scale weights, accuracy-sensitive output)
    y = jnp.dot(h2, w3_ref[...], preferred_element_type=jnp.float32) + b3_ref[...]
    o_ref[...] = jnp.tanh(y).astype(o_ref.dtype)


@functools.partial(jax.jit, static_argnames=("action_size",))
def actor_forward(state, params, *, action_size):
    """state: [batch, state_size] f32 -> [batch, action_size] f32."""
    w1, b1, w2, b2, w3, b3 = params
    batch, state_size = state.shape
    assert state_size <= LANE, "state_size > 128 needs a K-tiled fc1"

    tile_b = min(MAX_TILE_B, _round_up(batch, 8))
    bp = _round_up(batch, tile_b)

    # Pad batch rows to the tile and the K dim to 128 lanes (zeros are inert).
    state_p = jnp.pad(state.astype(jnp.float32),
                      ((0, bp - batch), (0, LANE - state_size)))

    full = lambda i: (0, 0)  # weights/biases resident in VMEM across the grid
    out_p = pl.pallas_call(
        actor_kernel,
        out_shape=jax.ShapeDtypeStruct((bp, LANE), jnp.float32),
        grid=(bp // tile_b,),
        in_specs=[
            pl.BlockSpec((tile_b, LANE), lambda i: (i, 0)),   # state tile
            pl.BlockSpec((LANE, HIDDEN), full),               # w1 (bf16)
            pl.BlockSpec((1, HIDDEN), full),                  # b1
            pl.BlockSpec((HIDDEN, HIDDEN), full),             # w2 (bf16)
            pl.BlockSpec((1, HIDDEN), full),                  # b2
            pl.BlockSpec((HIDDEN, LANE), full),               # w3 (f32, padded cols)
            pl.BlockSpec((1, LANE), full),                    # b3 (padded cols)
        ],
        out_specs=pl.BlockSpec((tile_b, LANE), lambda i: (i, 0)),
        compiler_params=pltpu.CompilerParams(
            dimension_semantics=("parallel",)),
    )(state_p, w1, b1, w2, b2, w3, b3)

    return out_p[:batch, :action_size]


def init_actor_params(key, state_size, action_size):
    """Raw f32 [in, out] weights mirroring the PyTorch module's reset_parameters.

    fc1/fc2 weights ~ U[-lim, lim], lim = sqrt(1 / out_features) (hidden_init
    uses weight.size()[0] == out_features). fc3 weights ~ U[-3e-3, 3e-3].
    Biases use the default PyTorch Linear init U[-1/sqrt(fan_in), 1/sqrt(fan_in)].
    """
    h1, h2 = HIDDEN, HIDDEN
    k = jax.random.split(key, 6)
    lim1 = (1.0 / h1) ** 0.5
    lim2 = (1.0 / h2) ** 0.5
    w1 = jax.random.uniform(k[0], (state_size, h1), jnp.float32, -lim1, lim1)
    w2 = jax.random.uniform(k[1], (h1, h2), jnp.float32, -lim2, lim2)
    w3 = jax.random.uniform(k[2], (h2, action_size), jnp.float32, -3e-3, 3e-3)
    b1 = jax.random.uniform(k[3], (1, h1), jnp.float32,
                            -(1.0 / state_size) ** 0.5, (1.0 / state_size) ** 0.5)
    b2 = jax.random.uniform(k[4], (1, h2), jnp.float32,
                            -(1.0 / h1) ** 0.5, (1.0 / h1) ** 0.5)
    b3 = jax.random.uniform(k[5], (1, action_size), jnp.float32,
                            -(1.0 / h2) ** 0.5, (1.0 / h2) ** 0.5)
    return w1, b1, w2, b2, w3, b3


def pack_actor_params(w1, b1, w2, b2, w3, b3):
    """Pad to lane-aligned shapes and cast fc1/fc2 weights to bf16 for the MXU."""
    state_size = w1.shape[0]
    action_size = w3.shape[1]
    assert state_size <= LANE and action_size <= LANE
    w1p = jnp.zeros((LANE, HIDDEN), jnp.float32).at[:state_size].set(w1)
    w3p = jnp.zeros((HIDDEN, LANE), jnp.float32).at[:, :action_size].set(w3)
    b3p = jnp.zeros((1, LANE), jnp.float32).at[:, :action_size].set(b3)
    return (w1p.astype(jnp.bfloat16), b1,
            w2.astype(jnp.bfloat16), b2,
            w3p, b3p)


if __name__ == "__main__":
    state_size = 24   # DDPG state size from the module docstring
    action_size = 2   # DDPG action size from the module docstring
    batch = 4

    key = jax.random.PRNGKey(0)
    k_params, k_state = jax.random.split(key)
    raw = init_actor_params(k_params, state_size, action_size)
    packed = pack_actor_params(*raw)
    state = jax.random.normal(k_state, (batch, state_size), jnp.float32)

    out = actor_forward(state, packed, action_size=action_size)
    jax.block_until_ready(out)

    # Pure-f32 JAX reference of the same math (kernel uses bf16 fc1/fc2 inputs,
    # so compare with a bf16-appropriate tolerance).
    w1, b1, w2, b2, w3, b3 = raw
    ref = jnp.tanh(
        jnp.maximum(jnp.maximum(state @ w1 + b1, 0.0) @ w2 + b2, 0.0) @ w3 + b3
    )
    assert out.shape == (batch, action_size)
    assert jnp.allclose(out, ref, atol=2e-2, rtol=2e-2), (
        float(jnp.max(jnp.abs(out - ref))))

    print("KERNEL_OK")
</pallas_src>

<mosaic_0001>
module attributes {stable_mosaic.version = 11 : i64} {
  func.func @actor_kernel(%arg0: i32, %arg1: memref<8x128xf32, #tpu.memory_space<vmem>>, %arg2: memref<128x128xbf16, #tpu.memory_space<vmem>>, %arg3: memref<1x128xf32, #tpu.memory_space<vmem>>, %arg4: memref<128x128xbf16, #tpu.memory_space<vmem>>, %arg5: memref<1x128xf32, #tpu.memory_space<vmem>>, %arg6: memref<128x128xf32, #tpu.memory_space<vmem>>, %arg7: memref<1x128xf32, #tpu.memory_space<vmem>>, %arg8: memref<8x128xf32, #tpu.memory_space<vmem>>) attributes {dimension_semantics = [#tpu.dimension_semantics<parallel>], iteration_bounds = array<i64: 1>, scalar_prefetch = 0 : i64, scratch_operands = 0 : i64, tpu.core_type = #tpu.core_type<tc>, window_params = [{transform_indices = @transform_0, window_bounds = array<i64: 8, 128>}, {pipeline_mode = #tpu.pipeline_mode<synchronous>, transform_indices = @transform_1, window_bounds = array<i64: 128, 128>}, {pipeline_mode = #tpu.pipeline_mode<synchronous>, transform_indices = @transform_2, window_bounds = array<i64: 1, 128>}, {pipeline_mode = #tpu.pipeline_mode<synchronous>, transform_indices = @transform_3, window_bounds = array<i64: 128, 128>}, {pipeline_mode = #tpu.pipeline_mode<synchronous>, transform_indices = @transform_4, window_bounds = array<i64: 1, 128>}, {pipeline_mode = #tpu.pipeline_mode<synchronous>, transform_indices = @transform_5, window_bounds = array<i64: 128, 128>}, {pipeline_mode = #tpu.pipeline_mode<synchronous>, transform_indices = @transform_6, window_bounds = array<i64: 1, 128>}, {transform_indices = @transform_7, window_bounds = array<i64: 8, 128>}]} {
    %c0 = arith.constant 0 : index
    %c0_0 = arith.constant 0 : index
    %0 = vector.load %arg1[%c0, %c0_0] : memref<8x128xf32, #tpu.memory_space<vmem>>, vector<8x128xf32>
    %1 = arith.truncf %0 : vector<8x128xf32> to vector<8x128xbf16>
    %c0_1 = arith.constant 0 : index
    %c0_2 = arith.constant 0 : index
    %2 = vector.load %arg2[%c0_1, %c0_2] : memref<128x128xbf16, #tpu.memory_space<vmem>>, vector<128x128xbf16>
    %cst = arith.constant dense<0.000000e+00> : vector<8x128xf32>
    %3 = tpu.matmul %1, %2, %cst {dimension_numbers = #tpu.dot_dimension_numbers<[1], [0], [0], [1], [0, 0, 1, 1], [], []>} : vector<8x128xbf16>, vector<128x128xbf16>, vector<8x128xf32> -> vector<8x128xf32>
    %c0_3 = arith.constant 0 : index
    %c0_4 = arith.constant 0 : index
    %4 = vector.load %arg3[%c0_3, %c0_4] : memref<1x128xf32, #tpu.memory_space<vmem>>, vector<1x128xf32>
    %5 = vector.broadcast %4 : vector<1x128xf32> to vector<8x128xf32>
    %6 = arith.addf %3, %5 : vector<8x128xf32>
    %cst_5 = arith.constant 0.000000e+00 : f32
    %7 = vector.broadcast %cst_5 : f32 to vector<8x128xf32>
    %8 = arith.maximumf %6, %7 : vector<8x128xf32>
    %9 = arith.truncf %8 : vector<8x128xf32> to vector<8x128xbf16>
    %c0_6 = arith.constant 0 : index
    %c0_7 = arith.constant 0 : index
    %10 = vector.load %arg4[%c0_6, %c0_7] : memref<128x128xbf16, #tpu.memory_space<vmem>>, vector<128x128xbf16>
    %cst_8 = arith.constant dense<0.000000e+00> : vector<8x128xf32>
    %11 = tpu.matmul %9, %10, %cst_8 {dimension_numbers = #tpu.dot_dimension_numbers<[1], [0], [0], [1], [0, 0, 1, 1], [], []>} : vector<8x128xbf16>, vector<128x128xbf16>, vector<8x128xf32> -> vector<8x128xf32>
    %c0_9 = arith.constant 0 : index
    %c0_10 = arith.constant 0 : index
    %12 = vector.load %arg5[%c0_9, %c0_10] : memref<1x128xf32, #tpu.memory_space<vmem>>, vector<1x128xf32>
    %13 = vector.broadcast %12 : vector<1x128xf32> to vector<8x128xf32>
    %14 = arith.addf %11, %13 : vector<8x128xf32>
    %cst_11 = arith.constant 0.000000e+00 : f32
    %15 = vector.broadcast %cst_11 : f32 to vector<8x128xf32>
    %16 = arith.maximumf %14, %15 : vector<8x128xf32>
    %c0_12 = arith.constant 0 : index
    %c0_13 = arith.constant 0 : index
    %17 = vector.load %arg6[%c0_12, %c0_13] : memref<128x128xf32, #tpu.memory_space<vmem>>, vector<128x128xf32>
    %cst_14 = arith.constant dense<0.000000e+00> : vector<8x128xf32>
    %18 = tpu.matmul %16, %17, %cst_14 {dimension_numbers = #tpu.dot_dimension_numbers<[1], [0], [0], [1], [0, 0, 1, 1], [], []>} : vector<8x128xf32>, vector<128x128xf32>, vector<8x128xf32> -> vector<8x128xf32>
    %c0_15 = arith.constant 0 : index
    %c0_16 = arith.constant 0 : index
    %19 = vector.load %arg7[%c0_15, %c0_16] : memref<1x128xf32, #tpu.memory_space<vmem>>, vector<1x128xf32>
    %20 = vector.broadcast %19 : vector<1x128xf32> to vector<8x128xf32>
    %21 = arith.addf %18, %20 : vector<8x128xf32>
    %22 = math.tanh %21 : vector<8x128xf32>
    %c0_17 = arith.constant 0 : index
    %c0_18 = arith.constant 0 : index
    %23 = vector.load %arg8[%c0_17, %c0_18] : memref<8x128xf32, #tpu.memory_space<vmem>>, vector<8x128xf32>
    tpu.vector_store %arg8[%c0_17, %c0_18], %22 {strides = array<i32>} : memref<8x128xf32, #tpu.memory_space<vmem>>, vector<8x128xf32>,
    return
  }
  func.func @transform_0(%arg0: i32) -> (i32, i32) {
    %c0_i32 = arith.constant 0 : i32
    %c0_i32_0 = arith.constant 0 : i32
    return %arg0, %c0_i32 : i32, i32
  }
  func.func @transform_1(%arg0: i32) -> (i32, i32) {
    %c0_i32 = arith.constant 0 : i32
    %c0_i32_0 = arith.constant 0 : i32
    %c0_i32_1 = arith.constant 0 : i32
    return %c0_i32, %c0_i32_0 : i32, i32
  }
  func.func @transform_2(%arg0: i32) -> (i32, i32) {
    %c0_i32 = arith.constant 0 : i32
    %c0_i32_0 = arith.constant 0 : i32
    %c0_i32_1 = arith.constant 0 : i32
    return %c0_i32, %c0_i32_0 : i32, i32
  }
  func.func @transform_3(%arg0: i32) -> (i32, i32) {
    %c0_i32 = arith.constant 0 : i32
    %c0_i32_0 = arith.constant 0 : i32
    %c0_i32_1 = arith.constant 0 : i32
    return %c0_i32, %c0_i32_0 : i32, i32
  }
  func.func @transform_4(%arg0: i32) -> (i32, i32) {
    %c0_i32 = arith.constant 0 : i32
    %c0_i32_0 = arith.constant 0 : i32
    %c0_i32_1 = arith.constant 0 : i32
    return %c0_i32, %c0_i32_0 : i32, i32
  }
  func.func @transform_5(%arg0: i32) -> (i32, i32) {
    %c0_i32 = arith.constant 0 : i32
    %c0_i32_0 = arith.constant 0 : i32
    %c0_i32_1 = arith.constant 0 : i32
    return %c0_i32, %c0_i32_0 : i32, i32
  }
  func.func @transform_6(%arg0: i32) -> (i32, i32) {
    %c0_i32 = arith.constant 0 : i32
    %c0_i32_0 = arith.constant 0 : i32
    %c0_i32_1 = arith.constant 0 : i32
    return %c0_i32, %c0_i32_0 : i32, i32
  }
  func.func @transform_7(%arg0: i32) -> (i32, i32) {
    %c0_i32 = arith.constant 0 : i32
    %c0_i32_0 = arith.constant 0 : i32
    return %arg0, %c0_i32 : i32, i32
  }
}

</mosaic_0001>

<llo_original>
// kernel: actor_forward.1
$region0: #{actor_forward.1}
  #allocation0 [shape = 'u32[]', space=smem, size = 0x4, offset = 0x4, fixed_abs, tag = 'smem constant byte address 0x4 - core index']
  #allocation1 [shape = 'u32[144,128]{1,0:T(1,128)}', space=vmem, size = 0x12000, scoped, tag = 'internal scratch']
  %s0 = inlined_call_operand.vmem [shape: f32[8,128], index: 0, kind: input, shape index: {}]
  %s1 = inlined_call_operand.hbm [shape: bf16[128,128], index: 1, kind: input, shape index: {}]
  %s2 = inlined_call_operand.vmem [shape: f32[1,128], index: 2, kind: input, shape index: {}]
  %s3 = inlined_call_operand.hbm [shape: bf16[128,128], index: 3, kind: input, shape index: {}]
  %s4 = inlined_call_operand.vmem [shape: f32[1,128], index: 4, kind: input, shape index: {}]
  %s5 = inlined_call_operand.hbm [shape: f32[128,128], index: 5, kind: input, shape index: {}]
  %s6 = inlined_call_operand.vmem [shape: f32[1,128], index: 6, kind: input, shape index: {}]
  %s7 = inlined_call_operand.vmem [shape: f32[8,128], index: 7, kind: output, shape index: {}]
  %s8 = sld [smem:[#allocation0]]
  $region50: #{actor_forward.1} parent=0
    _
  %s10 = ssub.s32 1, %s8
  %s11 = scalar_select 0, %s10, %s8
  $region1: #{actor_forward.1} parent=0
    #allocation2 [shape = 'u8[32768]{0}', space=vmem, size = 0x8000, scoped, tag = 'input window, operand 1, single buffered']
    #allocation3 [shape = 's32[1]{0}', space=sflag, size = 0x4, scoped, tag = 'scoped memory for actor_forward.1']
    #allocation4 [shape = 'u8[32768]{0}', space=vmem, size = 0x8000, scoped, tag = 'input window, operand 3, single buffered']
    #allocation5 [shape = 's32[1]{0}', space=sflag, size = 0x4, scoped, tag = 'scoped memory for actor_forward.1']
    #allocation6 [shape = 'u8[65536]{0}', space=vmem, size = 0x10000, scoped, tag = 'input window, operand 5, single buffered']
    %12 = vsyncpa [#allocation3], 0
    %13 = vsyncpa [#allocation5], 0
    // Predicated region
    $region2: #{actor_forward.1} parent=1 // pred_check
      _
    $region3: #{actor_forward.1} parent=1 // pred_check_branch
      %15 = sbr.rel (0) target = $region5
    $region4: #{actor_forward.1} parent=1 // pred_region
      _
    $region5: #{actor_forward.1} parent=1 // pred_fallthru
      _
    // Predicated region
    $region6: #{actor_forward.1} parent=1 // pred_check
      _
    $region7: #{actor_forward.1} parent=1 // pred_check_branch
      %17 = sbr.rel (0) target = $region9
    $region8: #{actor_forward.1} parent=1 // pred_region
      %s19 = ssub.s32 1024, 1024
      %20 = vsyncadd [#allocation3], %s19
      %s21 = sshll.u32 [#allocation2], 4
      %s22 = int_to_ptr.vmem [resolvable:$true] %s21
      %27 = dma.hbm_to_vmem [thread:$0]  %s1, 1024, %s22, [#allocation3], 64, 64, 4
    $region9: #{actor_forward.1} parent=1 // pred_fallthru
      _
    // Predicated region
    $region10: #{actor_forward.1} parent=1 // pred_check
      _
    $region11: #{actor_forward.1} parent=1 // pred_check_branch
      %29 = sbr.rel (0) target = $region13
    $region12: #{actor_forward.1} parent=1 // pred_region
      _
    $region13: #{actor_forward.1} parent=1 // pred_fallthru
      _
    // Predicated region
    $region14: #{actor_forward.1} parent=1 // pred_check
      _
    $region15: #{actor_forward.1} parent=1 // pred_check_branch
      %31 = sbr.rel (0) target = $region17
    $region16: #{actor_forward.1} parent=1 // pred_region
      %s33 = ssub.s32 1024, 1024
      %34 = vsyncadd [#allocation5], %s33
      %s35 = sshll.u32 [#allocation4], 4
      %s36 = int_to_ptr.vmem [resolvable:$true] %s35
      %41 = dma.hbm_to_vmem [thread:$0]  %s3, 1024, %s36, [#allocation5], 64, 64, 4
    $region17: #{actor_forward.1} parent=1 // pred_fallthru
      _
    // Predicated region
    $region18: #{actor_forward.1} parent=1 // pred_check
      _
    $region19: #{actor_forward.1} parent=1 // pred_check_branch
      %43 = sbr.rel (0) target = $region21
    $region20: #{actor_forward.1} parent=1 // pred_region
      _
    $region21: #{actor_forward.1} parent=1 // pred_fallthru
      _
    // Predicated region
    $region22: #{actor_forward.1} parent=1 // pred_check
      _
    $region23: #{actor_forward.1} parent=1 // pred_check_branch
      %45 = sbr.rel (0) target = $region25
    $region24: #{actor_forward.1} parent=1 // pred_region
      %s47 = ssub.s32 2048, 2048
      %48 = vsyncadd [#allocation5], %s47
      %s49 = sshll.u32 [#allocation6], 4
      %s50 = int_to_ptr.vmem [resolvable:$true] %s49
      %55 = dma.hbm_to_vmem [thread:$0]  %s5, 2048, %s50, [#allocation5], 128, 128, 8
    $region25: #{actor_forward.1} parent=1 // pred_fallthru
      _
    // Predicated region
    $region26: #{actor_forward.1} parent=1 // pred_check
      _
    $region27: #{actor_forward.1} parent=1 // pred_check_branch
      %57 = sbr.rel (0) target = $region29
    $region28: #{actor_forward.1} parent=1 // pred_region
      _
    $region29: #{actor_forward.1} parent=1 // pred_fallthru
      _
    // Predicated region
    $region30: #{actor_forward.1} parent=1 // pred_check
      _
    $region31: #{actor_forward.1} parent=1 // pred_check_branch
      %59 = sbr.rel (0) target = $region33
    $region32: #{actor_forward.1} parent=1 // pred_region
      %60 = dma.done [#allocation3], 1024
    $region33: #{actor_forward.1} parent=1 // pred_fallthru
      _
    // Predicated region
    $region34: #{actor_forward.1} parent=1 // pred_check
      _
    $region35: #{actor_forward.1} parent=1 // pred_check_branch
      %62 = sbr.rel (0) target = $region37
    $region36: #{actor_forward.1} parent=1 // pred_region
      %63 = dma.done [#allocation5], 1024
    $region37: #{actor_forward.1} parent=1 // pred_fallthru
      _
    // Predicated region
    $region38: #{actor_forward.1} parent=1 // pred_check
      _
    $region39: #{actor_forward.1} parent=1 // pred_check_branch
      %65 = sbr.rel (0) target = $region41
    $region40: #{actor_forward.1} parent=1 // pred_region
      %66 = dma.done [#allocation5], 2048
    $region41: #{actor_forward.1} parent=1 // pred_fallthru
      _
    %v68 = vld [vmem:[%s0] sm:$0xff]
    %v69 = vpack.c.bf16 %v68, %v68
    %v70 = vld [vmem:[#allocation2] sm:$0xf]
    %v71 = vld [vmem:[#allocation2 + $0x4] sm:$0xf]
    %v72 = vld [vmem:[#allocation2 + $0x8] sm:$0xf]
    %v73 = vld [vmem:[#allocation2 + $0xc] sm:$0xf]
    %v74 = vld [vmem:[#allocation2 + $0x10] sm:$0xf]
    %v75 = vld [vmem:[#allocation2 + $0x14] sm:$0xf]
    %v76 = vld [vmem:[#allocation2 + $0x18] sm:$0xf]
    %v77 = vld [vmem:[#allocation2 + $0x1c] sm:$0xf]
    %v78 = vld [vmem:[#allocation2 + $0x20] sm:$0xf]
    %v79 = vld [vmem:[#allocation2 + $0x24] sm:$0xf]
    %v80 = vld [vmem:[#allocation2 + $0x28] sm:$0xf]
    %v81 = vld [vmem:[#allocation2 + $0x2c] sm:$0xf]
    %v82 = vld [vmem:[#allocation2 + $0x30] sm:$0xf]
    %v83 = vld [vmem:[#allocation2 + $0x34] sm:$0xf]
    %v84 = vld [vmem:[#allocation2 + $0x38] sm:$0xf]
    %v85 = vld [vmem:[#allocation2 + $0x3c] sm:$0xf]
    %v86 = vld [vmem:[%s2] sm:$0x1]
    %v88 = vlaneseq
    %v89 = vshrl.u32 %v88, 7
    %v90 = vsub.s32 0, %v89
    %v91 = vrot.slane %v86, %v90
    %v109 = vunpack.c.l.b16 %v70
    %v110 = vunpack.c.l.b16 %v71
    %v111 = vunpack.c.l.b16 %v72
    %v112 = vunpack.c.l.b16 %v73
    %v113 = vunpack.c.l.b16 %v74
    %v114 = vunpack.c.l.b16 %v75
    %v115 = vunpack.c.l.b16 %v76
    %v116 = vunpack.c.l.b16 %v77
    %v117 = vunpack.c.l.b16 %v78
    %v118 = vunpack.c.l.b16 %v79
    %v119 = vunpack.c.l.b16 %v80
    %v120 = vunpack.c.l.b16 %v81
    %v121 = vunpack.c.l.b16 %v82
    %v122 = vunpack.c.l.b16 %v83
    %v123 = vunpack.c.l.b16 %v84
    %v124 = vunpack.c.l.b16 %v85
    %v125 = vpack.c.b16 %v110, %v109
    %v126 = vpack.c.b16 %v112, %v111
    %v127 = vpack.c.b16 %v114, %v113
    %v128 = vpack.c.b16 %v116, %v115
    %v129 = vpack.c.b16 %v118, %v117
    %v130 = vpack.c.b16 %v120, %v119
    %v131 = vpack.c.b16 %v122, %v121
    %v132 = vpack.c.b16 %v124, %v123
    %141 = vmatprep.subr.bf16.mxu0 0
    %142 = vmatpush1.bf16.msra.mxu0 %v125
    %143 = vmatprep.subr.bf16.mxu0 0
    %144 = vmatpush1.bf16.msra.mxu0 %v126
    %145 = vmatprep.subr.bf16.mxu0 0
    %146 = vmatpush1.bf16.msra.mxu0 %v127
    %147 = vmatprep.subr.bf16.mxu0 0
    %148 = vmatpush1.bf16.msra.mxu0 %v128
    %149 = vmatprep.subr.bf16.mxu0 0
    %150 = vmatpush1.bf16.msra.mxu0 %v129
    %151 = vmatprep.subr.bf16.mxu0 0
    %152 = vmatpush1.bf16.msra.mxu0 %v130
    %153 = vmatprep.subr.bf16.mxu0 0
    %154 = vmatpush1.bf16.msra.mxu0 %v131
    %155 = vmatprep.subr.bf16.mxu0 0
    %156 = vmatpush1.bf16.msra.mxu0 %v132
    %157 = vmatprep.subr.bf16.mxu0 0
    %158 = vmatpush1.bf16.msra.mxu0 0
    %159 = vmatprep.subr.bf16.mxu0 0
    %160 = vmatpush1.bf16.msra.mxu0 0
    %161 = vmatprep.subr.bf16.mxu0 0
    %162 = vmatpush1.bf16.msra.mxu0 0
    %163 = vmatprep.subr.bf16.mxu0 0
    %164 = vmatpush1.bf16.msra.mxu0 0
    %165 = vmatprep.subr.bf16.mxu0 0
    %166 = vmatpush1.bf16.msra.mxu0 0
    %167 = vmatprep.subr.bf16.mxu0 0
    %168 = vmatpush1.bf16.msra.mxu0 0
    %169 = vmatprep.subr.bf16.mxu0 0
    %170 = vmatpush1.bf16.msra.mxu0 0
    %171 = vmatprep.subr.bf16.mxu0 0
    %172 = vmatpush1.bf16.msra.mxu0 0
    %173 = vmatprep.mubr.bf16.mxu0 0
    %174 = vmatmul.mubr.bf16.gmra.mrb[0].mxu0 %v69
    %v175 = vpop.f32.mrb[0].mxu0
    %v176 = vadd.f32 %v91, %v175
    %v177 = vpop.f32.mrb[0].mxu0
    %v178 = vpop.f32.mrb[0].mxu0
    %v179 = vpop.f32.mrb[0].mxu0
    %180 = vdwg.mxu0
    %v181 = vmax.f32 %v176, 0.0
    %v182 = vpack.c.bf16 %v181, %v181
    %v183 = vld [vmem:[#allocation4] sm:$0xf]
    %v184 = vld [vmem:[#allocation4 + $0x4] sm:$0xf]
    %v185 = vld [vmem:[#allocation4 + $0x8] sm:$0xf]
    %v186 = vld [vmem:[#allocation4 + $0xc] sm:$0xf]
    %v187 = vld [vmem:[#allocation4 + $0x10] sm:$0xf]
    %v188 = vld [vmem:[#allocation4 + $0x14] sm:$0xf]
    %v189 = vld [vmem:[#allocation4 + $0x18] sm:$0xf]
    %v190 = vld [vmem:[#allocation4 + $0x1c] sm:$0xf]
    %v191 = vld [vmem:[#allocation4 + $0x20] sm:$0xf]
    %v192 = vld [vmem:[#allocation4 + $0x24] sm:$0xf]
    %v193 = vld [vmem:[#allocation4 + $0x28] sm:$0xf]
    %v194 = vld [vmem:[#allocation4 + $0x2c] sm:$0xf]
    %v195 = vld [vmem:[#allocation4 + $0x30] sm:$0xf]
    %v196 = vld [vmem:[#allocation4 + $0x34] sm:$0xf]
    %v197 = vld [vmem:[#allocation4 + $0x38] sm:$0xf]
    %v198 = vld [vmem:[#allocation4 + $0x3c] sm:$0xf]
    %v199 = vld [vmem:[%s4] sm:$0x1]
    %v201 = vlaneseq
    %v202 = vshrl.u32 %v201, 7
    %v203 = vsub.s32 0, %v202
    %v204 = vrot.slane %v199, %v203
    %v222 = vunpack.c.l.b16 %v183
    %v223 = vunpack.c.l.b16 %v184
    %v224 = vunpack.c.l.b16 %v185
    %v225 = vunpack.c.l.b16 %v186
    %v226 = vunpack.c.l.b16 %v187
    %v227 = vunpack.c.l.b16 %v188
    %v228 = vunpack.c.l.b16 %v189
    %v229 = vunpack.c.l.b16 %v190
    %v230 = vunpack.c.l.b16 %v191
    %v231 = vunpack.c.l.b16 %v192
    %v232 = vunpack.c.l.b16 %v193
    %v233 = vunpack.c.l.b16 %v194
    %v234 = vunpack.c.l.b16 %v195
    %v235 = vunpack.c.l.b16 %v196
    %v236 = vunpack.c.l.b16 %v197
    %v237 = vunpack.c.l.b16 %v198
    %v238 = vpack.c.b16 %v223, %v222
    %v239 = vpack.c.b16 %v225, %v224
    %v240 = vpack.c.b16 %v227, %v226
    %v241 = vpack.c.b16 %v229, %v228
    %v242 = vpack.c.b16 %v231, %v230
    %v243 = vpack.c.b16 %v233, %v232
    %v244 = vpack.c.b16 %v235, %v234
    %v245 = vpack.c.b16 %v237, %v236
    %254 = vmatprep.subr.bf16.mxu0 0
    %255 = vmatpush1.bf16.msra.mxu0 %v238
    %256 = vmatprep.subr.bf16.mxu0 0
    %257 = vmatpush1.bf16.msra.mxu0 %v239
    %258 = vmatprep.subr.bf16.mxu0 0
    %259 = vmatpush1.bf16.msra.mxu0 %v240
    %260 = vmatprep.subr.bf16.mxu0 0
    %261 = vmatpush1.bf16.msra.mxu0 %v241
    %262 = vmatprep.subr.bf16.mxu0 0
    %263 = vmatpush1.bf16.msra.mxu0 %v242
    %264 = vmatprep.subr.bf16.mxu0 0
    %265 = vmatpush1.bf16.msra.mxu0 %v243
    %266 = vmatprep.subr.bf16.mxu0 0
    %267 = vmatpush1.bf16.msra.mxu0 %v244
    %268 = vmatprep.subr.bf16.mxu0 0
    %269 = vmatpush1.bf16.msra.mxu0 %v245
    %270 = vmatprep.subr.bf16.mxu0 0
    %271 = vmatpush1.bf16.msra.mxu0 0
    %272 = vmatprep.subr.bf16.mxu0 0
    %273 = vmatpush1.bf16.msra.mxu0 0
    %274 = vmatprep.subr.bf16.mxu0 0
    %275 = vmatpush1.bf16.msra.mxu0 0
    %276 = vmatprep.subr.bf16.mxu0 0
    %277 = vmatpush1.bf16.msra.mxu0 0
    %278 = vmatprep.subr.bf16.mxu0 0
    %279 = vmatpush1.bf16.msra.mxu0 0
    %280 = vmatprep.subr.bf16.mxu0 0
    %281 = vmatpush1.bf16.msra.mxu0 0
    %282 = vmatprep.subr.bf16.mxu0 0
    %283 = vmatpush1.bf16.msra.mxu0 0
    %284 = vmatprep.subr.bf16.mxu0 0
    %285 = vmatpush1.bf16.msra.mxu0 0
    %286 = vmatprep.mubr.bf16.mxu0 0
    %287 = vmatmul.mubr.bf16.gmra.mrb[0].mxu0 %v182
    %v288 = vpop.f32.mrb[0].mxu0
    %v289 = vadd.f32 %v204, %v288
    %v290 = vpop.f32.mrb[0].mxu0
    %v291 = vpop.f32.mrb[0].mxu0
    %v292 = vpop.f32.mrb[0].mxu0
    %293 = vdwg.mxu0
    %v294 = vmax.f32 %v289, 0.0
    %v295 = vld [vmem:[#allocation6] sm:$0xff]
    %v296 = vld [vmem:[#allocation6 + $0x8] sm:$0xff]
    %v297 = vld [vmem:[#allocation6 + $0x10] sm:$0xff]
    %v298 = vld [vmem:[#allocation6 + $0x18] sm:$0xff]
    %v299 = vld [vmem:[#allocation6 + $0x20] sm:$0xff]
    %v300 = vld [vmem:[#allocation6 + $0x28] sm:$0xff]
    %v301 = vld [vmem:[#allocation6 + $0x30] sm:$0xff]
    %v302 = vld [vmem:[#allocation6 + $0x38] sm:$0xff]
    %v303 = vld [vmem:[#allocation6 + $0x40] sm:$0xff]
    %v304 = vld [vmem:[#allocation6 + $0x48] sm:$0xff]
    %v305 = vld [vmem:[#allocation6 + $0x50] sm:$0xff]
    %v306 = vld [vmem:[#allocation6 + $0x58] sm:$0xff]
    %v307 = vld [vmem:[#allocation6 + $0x60] sm:$0xff]
    %v308 = vld [vmem:[#allocation6 + $0x68] sm:$0xff]
    %v309 = vld [vmem:[#allocation6 + $0x70] sm:$0xff]
    %v310 = vld [vmem:[#allocation6 + $0x78] sm:$0xff]
    %v311 = vld [vmem:[%s6] sm:$0x1]
    %v313 = vlaneseq
    %v314 = vshrl.u32 %v313, 7
    %v315 = vsub.s32 0, %v314
    %v316 = vrot.slane %v311, %v315
    %318 = vmatprep.subr.mxu0 0.0
    %319 = vmatpush1.msra.mxu0 %v295
    %320 = vmatprep.subr.mxu0 0.0
    %321 = vmatpush1.msra.mxu0 %v296
    %322 = vmatprep.subr.mxu0 0.0
    %323 = vmatpush1.msra.mxu0 %v297
    %324 = vmatprep.subr.mxu0 0.0
    %325 = vmatpush1.msra.mxu0 %v298
    %326 = vmatprep.subr.mxu0 0.0
    %327 = vmatpush1.msra.mxu0 %v299
    %328 = vmatprep.subr.mxu0 0.0
    %329 = vmatpush1.msra.mxu0 %v300
    %330 = vmatprep.subr.mxu0 0.0
    %331 = vmatpush1.msra.mxu0 %v301
    %332 = vmatprep.subr.mxu0 0.0
    %333 = vmatpush1.msra.mxu0 %v302
    %334 = vmatprep.subr.mxu0 0.0
    %335 = vmatpush1.msra.mxu0 %v303
    %336 = vmatprep.subr.mxu0 0.0
    %337 = vmatpush1.msra.mxu0 %v304
    %338 = vmatprep.subr.mxu0 0.0
    %339 = vmatpush1.msra.mxu0 %v305
    %340 = vmatprep.subr.mxu0 0.0
    %341 = vmatpush1.msra.mxu0 %v306
    %342 = vmatprep.subr.mxu0 0.0
    %343 = vmatpush1.msra.mxu0 %v307
    %344 = vmatprep.subr.mxu0 0.0
    %345 = vmatpush1.msra.mxu0 %v308
    %346 = vmatprep.subr.mxu0 0.0
    %347 = vmatpush1.msra.mxu0 %v309
    %348 = vmatprep.subr.mxu0 0.0
    %349 = vmatpush1.msra.mxu0 %v310
    %350 = vmatprep.subr.mxu0 0.0
    %351 = vmatpush1.msra.mxu0 0.0
    %352 = vmatprep.subr.mxu0 0.0
    %353 = vmatpush1.msra.mxu0 0.0
    %354 = vmatprep.subr.mxu0 0.0
    %355 = vmatpush1.msra.mxu0 0.0
    %356 = vmatprep.subr.mxu0 0.0
    %357 = vmatpush1.msra.mxu0 0.0
    %358 = vmatprep.subr.mxu0 0.0
    %359 = vmatpush1.msra.mxu0 0.0
    %360 = vmatprep.subr.mxu0 0.0
    %361 = vmatpush1.msra.mxu0 0.0
    %362 = vmatprep.subr.mxu0 0.0
    %363 = vmatpush1.msra.mxu0 0.0
    %364 = vmatprep.subr.mxu0 0.0
    %365 = vmatpush1.msra.mxu0 0.0
    %366 = vmatprep.subr.mxu0 0.0
    %367 = vmatpush1.msra.mxu0 0.0
    %368 = vmatprep.subr.mxu0 0.0
    %369 = vmatpush1.msra.mxu0 0.0
    %370 = vmatprep.subr.mxu0 0.0
    %371 = vmatpush1.msra.mxu0 0.0
    %372 = vmatprep.subr.mxu0 0.0
    %373 = vmatpush1.msra.mxu0 0.0
    %374 = vmatprep.subr.mxu0 0.0
    %375 = vmatpush1.msra.mxu0 0.0
    %376 = vmatprep.subr.mxu0 0.0
    %377 = vmatpush1.msra.mxu0 0.0
    %378 = vmatprep.subr.mxu0 0.0
    %379 = vmatpush1.msra.mxu0 0.0
    %380 = vmatprep.subr.mxu0 0.0
    %381 = vmatpush1.msra.mxu0 0.0
    %382 = vmatprep.mubr.f32.mxu0 0.0
    %383 = vmatmul.mubr.f32.gmra.mrb[0].mxu0 %v294
    %v384 = vpop.f32.mrb[0].mxu0
    %v385 = vadd.f32 %v316, %v384
    %v386 = vpop.f32.mrb[0].mxu0
    %387 = vdwg.mxu0
    %v388 = vtanh.pop %v385
    %389 = vst [vmem:[%s7] sm:$0xff] %v388
    // Predicated region
    $region42: #{actor_forward.1} parent=1 // pred_check
      _
    $region43: #{actor_forward.1} parent=1 // pred_check_branch
      %391 = sbr.rel (0) target = $region45
    $region44: #{actor_forward.1} parent=1 // pred_region
      _
    $region45: #{actor_forward.1} parent=1 // pred_fallthru
      _
    // Predicated region
    $region46: #{actor_forward.1} parent=1 // pred_check
      _
    $region47: #{actor_forward.1} parent=1 // pred_check_branch
      %393 = sbr.rel (0) target = $region49
    $region48: #{actor_forward.1} parent=1 // pred_region
      _
    $region49: #{actor_forward.1} parent=1 // pred_fallthru
      _
    %394 = vsyncpa [#allocation3], 1
    %395 = vsyncpa [#allocation5], 1

</llo_original>
